<compile_context>
chip_gen: v7x
topology: tpu7x:2x2x1
jax: 0.10.0
libtpu: 0.0.40
codegen_flags: <defaults>
</compile_context>

<pallas_src>
import functools

import jax
import jax.numpy as jnp
from jax.experimental import pallas as pl
from jax.experimental.pallas import tpu as pltpu


D_IN = 512        # d_output_FFNN[2]
D_HID = 512       # d_output_FFNN[3]
N_SPEAKERS = 28   # n_speakers
N_PAD = 128       # lane-dense padded output width (last dim multiple of 128)


def _round_up(x, m):
    return (x + m - 1) // m * m


def _row_tile_cap():
    """Per-generation cap on the row tile (VMEM-budget driven)."""
    try:
        kind = jax.devices()[0].device_kind.lower()
    except Exception:
        kind = ""
    if "v5 lite" in kind or "v5e" in kind or "v5lite" in kind:
        return 1024   # v5e: 16 MiB default scoped VMEM; also compute-bound
    return 2048       # v6e/v7x: ~18 MiB total at tm=2048, fits 32 MiB default


def _classifier_kernel(x_ref, w1_ref, b1_ref, w2_ref, b2_ref, o_ref):
    # x_ref:  (tm, D_IN)     f32 or bf16  VMEM
    # w1_ref: (D_IN, D_HID)  bf16         VMEM (resident, constant index_map)
    # b1_ref: (1, D_HID)     f32          VMEM
    # w2_ref: (D_HID, N_PAD) bf16         VMEM (zero-padded past column 28)
    # b2_ref: (1, N_PAD)     f32          VMEM (zero-padded past column 28)
    # o_ref:  (tm, N_PAD)    x.dtype      VMEM
    x = x_ref[...]
    if x.dtype != jnp.bfloat16:          # trace-time branch: no cast if bf16 in
        x = x.astype(jnp.bfloat16)
    h = jnp.dot(x, w1_ref[...], preferred_element_type=jnp.float32)
    h = jnp.maximum(h + b1_ref[...], 0.0)                 # bias + ReLU (VPU)
    o = jnp.dot(h.astype(jnp.bfloat16), w2_ref[...],
                preferred_element_type=jnp.float32)
    o_ref[...] = (o + b2_ref[...]).astype(o_ref.dtype)


@functools.partial(jax.jit, static_argnames=("tm",))
def classifier_forward(x, w1, b1, w2, b2, *, tm=None):
    """x: (B, S, D_IN) float32/bfloat16 -> (B, S*N_SPEAKERS), dtype follows x."""
    B, S, D = x.shape
    assert D == D_IN
    M = B * S
    out_dtype = x.dtype            # bf16 in -> bf16 out (halves output traffic)

    # bf16 tiles pack 16 rows per sublane group; f32 needs 8.
    align = 16 if x.dtype == jnp.bfloat16 else 8

    if tm is None:
        cap = _row_tile_cap()
        if M <= cap:
            # One tile, M_pad == M whenever M is already align-multiple:
            # no row-padding copy before or after the kernel.
            tm = _round_up(M, align)
        else:
            # Prefer a 128-multiple divisor of M (no row padding); among those
            # prefer an even grid so both v7x TensorCores get work.
            tm = cap
            best_any, best_even = None, None
            for cand in range(cap, 127, -128):
                if M % cand == 0:
                    if best_any is None:
                        best_any = cand
                    if (M // cand) % 2 == 0:
                        best_even = cand
                        break
            if best_even is not None:
                tm = best_even
            elif best_any is not None:
                tm = best_any
    tm = _round_up(tm, align)
    M_pad = _round_up(M, tm)

    # No dtype cast here (a standalone wrapper-side cast of x is a known
    # anti-pattern); just reshape, and pad rows only if unavoidable.
    x2d = x.reshape(M, D)
    if M_pad != M:
        x2d = jnp.pad(x2d, ((0, M_pad - M), (0, 0)))

    # Weights as bf16 MXU operands (tiny, one-time); biases stay f32.
    w1_bf = w1.astype(jnp.bfloat16)
    w2_pad = jnp.zeros((D_HID, N_PAD), jnp.bfloat16).at[:, :N_SPEAKERS].set(
        w2.astype(jnp.bfloat16))
    b1_2d = b1.reshape(1, D_HID).astype(jnp.float32)
    b2_pad = jnp.zeros((1, N_PAD), jnp.float32).at[:, :N_SPEAKERS].set(
        b2.astype(jnp.float32))

    grid_m = M_pad // tm
    x_bytes = jnp.dtype(x2d.dtype).itemsize
    o_bytes = jnp.dtype(out_dtype).itemsize
    flops = 2 * M_pad * D_IN * D_HID + 2 * M_pad * D_HID * N_PAD
    bytes_accessed = (M_pad * D_IN * x_bytes                # x read
                      + D_IN * D_HID * 2                    # W1 (bf16)
                      + D_HID * N_PAD * 2                   # W2 (bf16, padded)
                      + (D_HID + N_PAD) * 4                 # biases (f32)
                      + M_pad * N_PAD * o_bytes)            # output write

    # TODO(synk): on v7x, sweep pipeline_mode=pl.Buffered(3) on the x spec
    # (compute ~= DMA there); keep depth 2 on v6e/v5e.
    out_pad = pl.pallas_call(
        _classifier_kernel,
        out_shape=jax.ShapeDtypeStruct((M_pad, N_PAD), out_dtype),
        grid_spec=pltpu.PrefetchScalarGridSpec(
            num_scalar_prefetch=0,
            grid=(grid_m,),
            in_specs=[
                pl.BlockSpec((tm, D_IN), lambda i: (i, 0)),           # x rows
                pl.BlockSpec((D_IN, D_HID), lambda i: (0, 0)),        # W1
                pl.BlockSpec((1, D_HID), lambda i: (0, 0)),           # b1
                pl.BlockSpec((D_HID, N_PAD), lambda i: (0, 0)),       # W2
                pl.BlockSpec((1, N_PAD), lambda i: (0, 0)),           # b2
            ],
            out_specs=pl.BlockSpec((tm, N_PAD), lambda i: (i, 0)),
        ),
        compiler_params=pltpu.CompilerParams(
            dimension_semantics=("parallel",)),
        cost_estimate=pl.CostEstimate(
            flops=flops, transcendentals=0, bytes_accessed=bytes_accessed),
    )(x2d, w1_bf, b1_2d, w2_pad, b2_pad)

    # Strip row/lane padding, then nn.Flatten(): (B,S,28) -> (B, S*28).
    # When tm was chosen so M_pad == M, only the cheap lane slice remains.
    out = out_pad[:M, :N_SPEAKERS]
    return out.reshape(B, S * N_SPEAKERS)


def _init_linear(key, fan_in, fan_out):
    """Deterministic PyTorch-style uniform init: U(-1/sqrt(fan_in), +)."""
    kw, kb = jax.random.split(key)
    bound = 1.0 / jnp.sqrt(fan_in)
    w = jax.random.uniform(kw, (fan_in, fan_out), jnp.float32, -bound, bound)
    b = jax.random.uniform(kb, (fan_out,), jnp.float32, -bound, bound)
    return w, b


if __name__ == "__main__":
    key = jax.random.PRNGKey(0)
    kx, k1, k2 = jax.random.split(key, 3)

    # Small batch/seq; feature dims are fixed by the module (512 -> 512 -> 28).
    B, S = 2, 8
    x = jax.random.normal(kx, (B, S, D_IN), jnp.float32)

    w1, b1 = _init_linear(k1, D_IN, D_HID)        # FFNN4: Linear(512, 512)
    w2, b2 = _init_linear(k2, D_HID, N_SPEAKERS)  # lin1:  Linear(512, 28)

    y = classifier_forward(x, w1, b1, w2, b2)
    jax.block_until_ready(y)

    # Pure-JAX f32 reference (kernel uses bf16 MXU operands with f32
    # accumulation, so allow bf16-level tolerance).
    h_ref = jnp.maximum(x.reshape(B * S, D_IN) @ w1 + b1, 0.0)
    y_ref = (h_ref @ w2 + b2).reshape(B, S * N_SPEAKERS)
    assert y.shape == (B, S * N_SPEAKERS)
    assert y.dtype == x.dtype
    assert jnp.allclose(y, y_ref, atol=3e-2, rtol=3e-2)

    # Also exercise the bf16-input fast path (bf16 x in -> bf16 out, no casts).
    y_bf = classifier_forward(x.astype(jnp.bfloat16), w1, b1, w2, b2)
    jax.block_until_ready(y_bf)
    assert y_bf.dtype == jnp.bfloat16
    assert jnp.allclose(y_bf.astype(jnp.float32), y_ref, atol=8e-2, rtol=8e-2)

    print("KERNEL_OK")
</pallas_src>

<mosaic_0001>
module attributes {stable_mosaic.version = 11 : i64} {
  func.func @_classifier_kernel(%arg0: i32, %arg1: memref<16x512xf32, #tpu.memory_space<vmem>>, %arg2: memref<512x512xbf16, #tpu.memory_space<vmem>>, %arg3: memref<1x512xf32, #tpu.memory_space<vmem>>, %arg4: memref<512x128xbf16, #tpu.memory_space<vmem>>, %arg5: memref<1x128xf32, #tpu.memory_space<vmem>>, %arg6: memref<16x128xf32, #tpu.memory_space<vmem>>) attributes {dimension_semantics = [#tpu.dimension_semantics<parallel>], iteration_bounds = array<i64: 1>, scalar_prefetch = 0 : i64, scratch_operands = 0 : i64, tpu.core_type = #tpu.core_type<tc>, window_params = [{transform_indices = @transform_0, window_bounds = array<i64: 16, 512>}, {pipeline_mode = #tpu.pipeline_mode<synchronous>, transform_indices = @transform_1, window_bounds = array<i64: 512, 512>}, {pipeline_mode = #tpu.pipeline_mode<synchronous>, transform_indices = @transform_2, window_bounds = array<i64: 1, 512>}, {pipeline_mode = #tpu.pipeline_mode<synchronous>, transform_indices = @transform_3, window_bounds = array<i64: 512, 128>}, {pipeline_mode = #tpu.pipeline_mode<synchronous>, transform_indices = @transform_4, window_bounds = array<i64: 1, 128>}, {transform_indices = @transform_5, window_bounds = array<i64: 16, 128>}]} {
    %c0 = arith.constant 0 : index
    %c0_0 = arith.constant 0 : index
    %0 = vector.load %arg1[%c0, %c0_0] : memref<16x512xf32, #tpu.memory_space<vmem>>, vector<16x512xf32>
    %1 = arith.truncf %0 : vector<16x512xf32> to vector<16x512xbf16>
    %c0_1 = arith.constant 0 : index
    %c0_2 = arith.constant 0 : index
    %2 = vector.load %arg2[%c0_1, %c0_2] : memref<512x512xbf16, #tpu.memory_space<vmem>>, vector<512x512xbf16>
    %cst = arith.constant dense<0.000000e+00> : vector<16x512xf32>
    %3 = tpu.matmul %1, %2, %cst {dimension_numbers = #tpu.dot_dimension_numbers<[1], [0], [0], [1], [0, 0, 1, 1], [], []>} : vector<16x512xbf16>, vector<512x512xbf16>, vector<16x512xf32> -> vector<16x512xf32>
    %c0_3 = arith.constant 0 : index
    %c0_4 = arith.constant 0 : index
    %4 = vector.load %arg3[%c0_3, %c0_4] : memref<1x512xf32, #tpu.memory_space<vmem>>, vector<1x512xf32>
    %5 = vector.broadcast %4 : vector<1x512xf32> to vector<16x512xf32>
    %6 = arith.addf %3, %5 : vector<16x512xf32>
    %cst_5 = arith.constant 0.000000e+00 : f32
    %7 = vector.broadcast %cst_5 : f32 to vector<16x512xf32>
    %8 = arith.maximumf %6, %7 : vector<16x512xf32>
    %9 = arith.truncf %8 : vector<16x512xf32> to vector<16x512xbf16>
    %c0_6 = arith.constant 0 : index
    %c0_7 = arith.constant 0 : index
    %10 = vector.load %arg4[%c0_6, %c0_7] : memref<512x128xbf16, #tpu.memory_space<vmem>>, vector<512x128xbf16>
    %cst_8 = arith.constant dense<0.000000e+00> : vector<16x128xf32>
    %11 = tpu.matmul %9, %10, %cst_8 {dimension_numbers = #tpu.dot_dimension_numbers<[1], [0], [0], [1], [0, 0, 1, 1], [], []>} : vector<16x512xbf16>, vector<512x128xbf16>, vector<16x128xf32> -> vector<16x128xf32>
    %c0_9 = arith.constant 0 : index
    %c0_10 = arith.constant 0 : index
    %12 = vector.load %arg5[%c0_9, %c0_10] : memref<1x128xf32, #tpu.memory_space<vmem>>, vector<1x128xf32>
    %13 = vector.broadcast %12 : vector<1x128xf32> to vector<16x128xf32>
    %14 = arith.addf %11, %13 : vector<16x128xf32>
    %c0_11 = arith.constant 0 : index
    %c0_12 = arith.constant 0 : index
    %15 = vector.load %arg6[%c0_11, %c0_12] : memref<16x128xf32, #tpu.memory_space<vmem>>, vector<16x128xf32>
    tpu.vector_store %arg6[%c0_11, %c0_12], %14 {strides = array<i32>} : memref<16x128xf32, #tpu.memory_space<vmem>>, vector<16x128xf32>,
    return
  }
  func.func @transform_0(%arg0: i32) -> (i32, i32) {
    %c0_i32 = arith.constant 0 : i32
    %c0_i32_0 = arith.constant 0 : i32
    return %arg0, %c0_i32 : i32, i32
  }
  func.func @transform_1(%arg0: i32) -> (i32, i32) {
    %c0_i32 = arith.constant 0 : i32
    %c0_i32_0 = arith.constant 0 : i32
    %c0_i32_1 = arith.constant 0 : i32
    return %c0_i32, %c0_i32_0 : i32, i32
  }
  func.func @transform_2(%arg0: i32) -> (i32, i32) {
    %c0_i32 = arith.constant 0 : i32
    %c0_i32_0 = arith.constant 0 : i32
    %c0_i32_1 = arith.constant 0 : i32
    return %c0_i32, %c0_i32_0 : i32, i32
  }
  func.func @transform_3(%arg0: i32) -> (i32, i32) {
    %c0_i32 = arith.constant 0 : i32
    %c0_i32_0 = arith.constant 0 : i32
    %c0_i32_1 = arith.constant 0 : i32
    return %c0_i32, %c0_i32_0 : i32, i32
  }
  func.func @transform_4(%arg0: i32) -> (i32, i32) {
    %c0_i32 = arith.constant 0 : i32
    %c0_i32_0 = arith.constant 0 : i32
    %c0_i32_1 = arith.constant 0 : i32
    return %c0_i32, %c0_i32_0 : i32, i32
  }
  func.func @transform_5(%arg0: i32) -> (i32, i32) {
    %c0_i32 = arith.constant 0 : i32
    %c0_i32_0 = arith.constant 0 : i32
    return %arg0, %c0_i32 : i32, i32
  }
}

</mosaic_0001>

<llo_original>
// kernel: classifier_forward.1
$region0: #{classifier_forward.1}
  #allocation0 [shape = 'u32[]', space=smem, size = 0x4, offset = 0x4, fixed_abs, tag = 'smem constant byte address 0x4 - core index']
  #allocation1 [shape = 'u32[144,128]{1,0:T(1,128)}', space=vmem, size = 0x12000, scoped, tag = 'internal scratch']
  %s0 = inlined_call_operand.vmem [shape: f32[16,512], index: 0, kind: input, shape index: {}]
  %s1 = inlined_call_operand.vmem [shape: bf16[512,512], index: 1, kind: input, shape index: {}]
  %s2 = inlined_call_operand.vmem [shape: f32[1,512], index: 2, kind: input, shape index: {}]
  %s3 = inlined_call_operand.vmem [shape: bf16[512,128], index: 3, kind: input, shape index: {}]
  %s4 = inlined_call_operand.vmem [shape: f32[1,128], index: 4, kind: input, shape index: {}]
  %s5 = inlined_call_operand.vmem [shape: f32[16,128], index: 5, kind: output, shape index: {}]
  %s6 = sld [smem:[#allocation0]]
  $region30: #{classifier_forward.1} parent=0
    _
  %s8 = ssub.s32 1, %s6
  %s9 = scalar_select 0, %s8, %s6
  // Predicated region
  $region2: #{classifier_forward.1} parent=0 // pred_check
    _
  $region3: #{classifier_forward.1} parent=0 // pred_check_branch
    %11 = sbr.rel (0) target = $region5
  $region4: #{classifier_forward.1} parent=0 // pred_region
    _
  $region5: #{classifier_forward.1} parent=0 // pred_fallthru
    _
  // Predicated region
  $region6: #{classifier_forward.1} parent=0 // pred_check
    _
  $region7: #{classifier_forward.1} parent=0 // pred_check_branch
    %13 = sbr.rel (0) target = $region9
  $region8: #{classifier_forward.1} parent=0 // pred_region
    _
  $region9: #{classifier_forward.1} parent=0 // pred_fallthru
    _
  // Predicated region
  $region10: #{classifier_forward.1} parent=0 // pred_check
    _
  $region11: #{classifier_forward.1} parent=0 // pred_check_branch
    %15 = sbr.rel (0) target = $region13
  $region12: #{classifier_forward.1} parent=0 // pred_region
    _
  $region13: #{classifier_forward.1} parent=0 // pred_fallthru
    _
  // Predicated region
  $region14: #{classifier_forward.1} parent=0 // pred_check
    _
  $region15: #{classifier_forward.1} parent=0 // pred_check_branch
    %17 = sbr.rel (0) target = $region17
  $region16: #{classifier_forward.1} parent=0 // pred_region
    _
  $region17: #{classifier_forward.1} parent=0 // pred_fallthru
    _
  // Predicated region
  $region18: #{classifier_forward.1} parent=0 // pred_check
    _
  $region19: #{classifier_forward.1} parent=0 // pred_check_branch
    %19 = sbr.rel (0) target = $region21
  $region20: #{classifier_forward.1} parent=0 // pred_region
    _
  $region21: #{classifier_forward.1} parent=0 // pred_fallthru
    _
  %v21 = vld [vmem:[%s0] sm:$0xff]
  %v22 = vld [vmem:[%s0 + $0x8] sm:$0xff]
  %v23 = vld [vmem:[%s0 + $0x10] sm:$0xff]
  %v24 = vld [vmem:[%s0 + $0x18] sm:$0xff]
  %v25 = vld [vmem:[%s0 + $0x20] sm:$0xff]
  %v26 = vld [vmem:[%s0 + $0x28] sm:$0xff]
  %v27 = vld [vmem:[%s0 + $0x30] sm:$0xff]
  %v28 = vld [vmem:[%s0 + $0x38] sm:$0xff]
  %v29 = vpack.c.bf16 %v25, %v21
  %v30 = vpack.c.bf16 %v26, %v22
  %v31 = vpack.c.bf16 %v27, %v23
  %v32 = vpack.c.bf16 %v28, %v24
  %v33 = vld [vmem:[%s1] sm:$0xff]
  %v34 = vld [vmem:[%s1 + $0x8] sm:$0xff]
  %v35 = vld [vmem:[%s1 + $0x10] sm:$0xff]
  %v36 = vld [vmem:[%s1 + $0x18] sm:$0xff]
  %v37 = vld [vmem:[%s1 + $0x20] sm:$0xff]
  %v38 = vld [vmem:[%s1 + $0x28] sm:$0xff]
  %v39 = vld [vmem:[%s1 + $0x30] sm:$0xff]
  %v40 = vld [vmem:[%s1 + $0x38] sm:$0xff]
  %v41 = vld [vmem:[%s1 + $0x40] sm:$0xff]
  %v42 = vld [vmem:[%s1 + $0x48] sm:$0xff]
  %v43 = vld [vmem:[%s1 + $0x50] sm:$0xff]
  %v44 = vld [vmem:[%s1 + $0x58] sm:$0xff]
  %v45 = vld [vmem:[%s1 + $0x60] sm:$0xff]
  %v46 = vld [vmem:[%s1 + $0x68] sm:$0xff]
  %v47 = vld [vmem:[%s1 + $0x70] sm:$0xff]
  %v48 = vld [vmem:[%s1 + $0x78] sm:$0xff]
  %v49 = vld [vmem:[%s1 + $0x80] sm:$0xff]
  %v50 = vld [vmem:[%s1 + $0x88] sm:$0xff]
  %v51 = vld [vmem:[%s1 + $0x90] sm:$0xff]
  %v52 = vld [vmem:[%s1 + $0x98] sm:$0xff]
  %v53 = vld [vmem:[%s1 + $0xa0] sm:$0xff]
  %v54 = vld [vmem:[%s1 + $0xa8] sm:$0xff]
  %v55 = vld [vmem:[%s1 + $0xb0] sm:$0xff]
  %v56 = vld [vmem:[%s1 + $0xb8] sm:$0xff]
  %v57 = vld [vmem:[%s1 + $0xc0] sm:$0xff]
  %v58 = vld [vmem:[%s1 + $0xc8] sm:$0xff]
  %v59 = vld [vmem:[%s1 + $0xd0] sm:$0xff]
  %v60 = vld [vmem:[%s1 + $0xd8] sm:$0xff]
  %v61 = vld [vmem:[%s1 + $0xe0] sm:$0xff]
  %v62 = vld [vmem:[%s1 + $0xe8] sm:$0xff]
  %v63 = vld [vmem:[%s1 + $0xf0] sm:$0xff]
  %v64 = vld [vmem:[%s1 + $0xf8] sm:$0xff]
  %v65 = vld [vmem:[%s1 + $0x100] sm:$0xff]
  %v66 = vld [vmem:[%s1 + $0x108] sm:$0xff]
  %v67 = vld [vmem:[%s1 + $0x110] sm:$0xff]
  %v68 = vld [vmem:[%s1 + $0x118] sm:$0xff]
  %v69 = vld [vmem:[%s1 + $0x120] sm:$0xff]
  %v70 = vld [vmem:[%s1 + $0x128] sm:$0xff]
  %v71 = vld [vmem:[%s1 + $0x130] sm:$0xff]
  %v72 = vld [vmem:[%s1 + $0x138] sm:$0xff]
  %v73 = vld [vmem:[%s1 + $0x140] sm:$0xff]
  %v74 = vld [vmem:[%s1 + $0x148] sm:$0xff]
  %v75 = vld [vmem:[%s1 + $0x150] sm:$0xff]
  %v76 = vld [vmem:[%s1 + $0x158] sm:$0xff]
  %v77 = vld [vmem:[%s1 + $0x160] sm:$0xff]
  %v78 = vld [vmem:[%s1 + $0x168] sm:$0xff]
  %v79 = vld [vmem:[%s1 + $0x170] sm:$0xff]
  %v80 = vld [vmem:[%s1 + $0x178] sm:$0xff]
  %v81 = vld [vmem:[%s1 + $0x180] sm:$0xff]
  %v82 = vld [vmem:[%s1 + $0x188] sm:$0xff]
  %v83 = vld [vmem:[%s1 + $0x190] sm:$0xff]
  %v84 = vld [vmem:[%s1 + $0x198] sm:$0xff]
  %v85 = vld [vmem:[%s1 + $0x1a0] sm:$0xff]
  %v86 = vld [vmem:[%s1 + $0x1a8] sm:$0xff]
  %v87 = vld [vmem:[%s1 + $0x1b0] sm:$0xff]
  %v88 = vld [vmem:[%s1 + $0x1b8] sm:$0xff]
  %v89 = vld [vmem:[%s1 + $0x1c0] sm:$0xff]
  %v90 = vld [vmem:[%s1 + $0x1c8] sm:$0xff]
  %v91 = vld [vmem:[%s1 + $0x1d0] sm:$0xff]
  %v92 = vld [vmem:[%s1 + $0x1d8] sm:$0xff]
  %v93 = vld [vmem:[%s1 + $0x1e0] sm:$0xff]
  %v94 = vld [vmem:[%s1 + $0x1e8] sm:$0xff]
  %v95 = vld [vmem:[%s1 + $0x1f0] sm:$0xff]
  %v96 = vld [vmem:[%s1 + $0x1f8] sm:$0xff]
  %v97 = vld [vmem:[%s1 + $0x200] sm:$0xff]
  %v98 = vld [vmem:[%s1 + $0x208] sm:$0xff]
  %v99 = vld [vmem:[%s1 + $0x210] sm:$0xff]
  %v100 = vld [vmem:[%s1 + $0x218] sm:$0xff]
  %v101 = vld [vmem:[%s1 + $0x220] sm:$0xff]
  %v102 = vld [vmem:[%s1 + $0x228] sm:$0xff]
  %v103 = vld [vmem:[%s1 + $0x230] sm:$0xff]
  %v104 = vld [vmem:[%s1 + $0x238] sm:$0xff]
  %v105 = vld [vmem:[%s1 + $0x240] sm:$0xff]
  %v106 = vld [vmem:[%s1 + $0x248] sm:$0xff]
  %v107 = vld [vmem:[%s1 + $0x250] sm:$0xff]
  %v108 = vld [vmem:[%s1 + $0x258] sm:$0xff]
  %v109 = vld [vmem:[%s1 + $0x260] sm:$0xff]
  %v110 = vld [vmem:[%s1 + $0x268] sm:$0xff]
  %v111 = vld [vmem:[%s1 + $0x270] sm:$0xff]
  %v112 = vld [vmem:[%s1 + $0x278] sm:$0xff]
  %v113 = vld [vmem:[%s1 + $0x280] sm:$0xff]
  %v114 = vld [vmem:[%s1 + $0x288] sm:$0xff]
  %v115 = vld [vmem:[%s1 + $0x290] sm:$0xff]
  %v116 = vld [vmem:[%s1 + $0x298] sm:$0xff]
  %v117 = vld [vmem:[%s1 + $0x2a0] sm:$0xff]
  %v118 = vld [vmem:[%s1 + $0x2a8] sm:$0xff]
  %v119 = vld [vmem:[%s1 + $0x2b0] sm:$0xff]
  %v120 = vld [vmem:[%s1 + $0x2b8] sm:$0xff]
  %v121 = vld [vmem:[%s1 + $0x2c0] sm:$0xff]
  %v122 = vld [vmem:[%s1 + $0x2c8] sm:$0xff]
  %v123 = vld [vmem:[%s1 + $0x2d0] sm:$0xff]
  %v124 = vld [vmem:[%s1 + $0x2d8] sm:$0xff]
  %v125 = vld [vmem:[%s1 + $0x2e0] sm:$0xff]
  %v126 = vld [vmem:[%s1 + $0x2e8] sm:$0xff]
  %v127 = vld [vmem:[%s1 + $0x2f0] sm:$0xff]
  %v128 = vld [vmem:[%s1 + $0x2f8] sm:$0xff]
  %v129 = vld [vmem:[%s1 + $0x300] sm:$0xff]
  %v130 = vld [vmem:[%s1 + $0x308] sm:$0xff]
  %v131 = vld [vmem:[%s1 + $0x310] sm:$0xff]
  %v132 = vld [vmem:[%s1 + $0x318] sm:$0xff]
  %v133 = vld [vmem:[%s1 + $0x320] sm:$0xff]
  %v134 = vld [vmem:[%s1 + $0x328] sm:$0xff]
  %v135 = vld [vmem:[%s1 + $0x330] sm:$0xff]
  %v136 = vld [vmem:[%s1 + $0x338] sm:$0xff]
  %v137 = vld [vmem:[%s1 + $0x340] sm:$0xff]
  %v138 = vld [vmem:[%s1 + $0x348] sm:$0xff]
  %v139 = vld [vmem:[%s1 + $0x350] sm:$0xff]
  %v140 = vld [vmem:[%s1 + $0x358] sm:$0xff]
  %v141 = vld [vmem:[%s1 + $0x360] sm:$0xff]
  %v142 = vld [vmem:[%s1 + $0x368] sm:$0xff]
  %v143 = vld [vmem:[%s1 + $0x370] sm:$0xff]
  %v144 = vld [vmem:[%s1 + $0x378] sm:$0xff]
  %v145 = vld [vmem:[%s1 + $0x380] sm:$0xff]
  %v146 = vld [vmem:[%s1 + $0x388] sm:$0xff]
  %v147 = vld [vmem:[%s1 + $0x390] sm:$0xff]
  %v148 = vld [vmem:[%s1 + $0x398] sm:$0xff]
  %v149 = vld [vmem:[%s1 + $0x3a0] sm:$0xff]
  %v150 = vld [vmem:[%s1 + $0x3a8] sm:$0xff]
  %v151 = vld [vmem:[%s1 + $0x3b0] sm:$0xff]
  %v152 = vld [vmem:[%s1 + $0x3b8] sm:$0xff]
  %v153 = vld [vmem:[%s1 + $0x3c0] sm:$0xff]
  %v154 = vld [vmem:[%s1 + $0x3c8] sm:$0xff]
  %v155 = vld [vmem:[%s1 + $0x3d0] sm:$0xff]
  %v156 = vld [vmem:[%s1 + $0x3d8] sm:$0xff]
  %v157 = vld [vmem:[%s1 + $0x3e0] sm:$0xff]
  %v158 = vld [vmem:[%s1 + $0x3e8] sm:$0xff]
  %v159 = vld [vmem:[%s1 + $0x3f0] sm:$0xff]
  %v160 = vld [vmem:[%s1 + $0x3f8] sm:$0xff]
  %v161 = vld [vmem:[%s2] sm:$0xf]
  %v163 = vlaneseq
  %v164 = vshrl.u32 %v163, 7
  %v165 = vsub.s32 0, %v164
  %v166 = vrot.slane %v161, %v165
  %v167 = vlaneseq
  %v168 = vshrl.u32 %v167, 7
  %v169 = vsub.s32 1, %v168
  %v170 = vrot.slane %v161, %v169
  %v171 = vlaneseq
  %v172 = vshrl.u32 %v171, 7
  %v173 = vsub.s32 2, %v172
  %v174 = vrot.slane %v161, %v173
  %v175 = vlaneseq
  %v176 = vshrl.u32 %v175, 7
  %v177 = vsub.s32 3, %v176
  %v178 = vrot.slane %v161, %v177
  %v311 = vunpack.c.l.b16 %v33
  %v312 = vunpack.c.h.b16 %v33
  %v313 = vunpack.c.l.b16 %v34
  %v314 = vunpack.c.h.b16 %v34
  %v315 = vunpack.c.l.b16 %v35
  %v316 = vunpack.c.h.b16 %v35
  %v317 = vunpack.c.l.b16 %v36
  %v318 = vunpack.c.h.b16 %v36
  %v319 = vunpack.c.l.b16 %v37
  %v320 = vunpack.c.h.b16 %v37
  %v321 = vunpack.c.l.b16 %v38
  %v322 = vunpack.c.h.b16 %v38
  %v323 = vunpack.c.l.b16 %v39
  %v324 = vunpack.c.h.b16 %v39
  %v325 = vunpack.c.l.b16 %v40
  %v326 = vunpack.c.h.b16 %v40
  %v327 = vunpack.c.l.b16 %v41
  %v328 = vunpack.c.h.b16 %v41
  %v329 = vunpack.c.l.b16 %v42
  %v330 = vunpack.c.h.b16 %v42
  %v331 = vunpack.c.l.b16 %v43
  %v332 = vunpack.c.h.b16 %v43
  %v333 = vunpack.c.l.b16 %v44
  %v334 = vunpack.c.h.b16 %v44
  %v335 = vunpack.c.l.b16 %v45
  %v336 = vunpack.c.h.b16 %v45
  %v337 = vunpack.c.l.b16 %v46
  %v338 = vunpack.c.h.b16 %v46
  %v339 = vunpack.c.l.b16 %v47
  %v340 = vunpack.c.h.b16 %v47
  %v341 = vunpack.c.l.b16 %v48
  %v342 = vunpack.c.h.b16 %v48
  %v343 = vunpack.c.l.b16 %v49
  %v344 = vunpack.c.h.b16 %v49
  %v345 = vunpack.c.l.b16 %v50
  %v346 = vunpack.c.h.b16 %v50
  %v347 = vunpack.c.l.b16 %v51
  %v348 = vunpack.c.h.b16 %v51
  %v349 = vunpack.c.l.b16 %v52
  %v350 = vunpack.c.h.b16 %v52
  %v351 = vunpack.c.l.b16 %v53
  %v352 = vunpack.c.h.b16 %v53
  %v353 = vunpack.c.l.b16 %v54
  %v354 = vunpack.c.h.b16 %v54
  %v355 = vunpack.c.l.b16 %v55
  %v356 = vunpack.c.h.b16 %v55
  %v357 = vunpack.c.l.b16 %v56
  %v358 = vunpack.c.h.b16 %v56
  %v359 = vunpack.c.l.b16 %v57
  %v360 = vunpack.c.h.b16 %v57
  %v361 = vunpack.c.l.b16 %v58
  %v362 = vunpack.c.h.b16 %v58
  %v363 = vunpack.c.l.b16 %v59
  %v364 = vunpack.c.h.b16 %v59
  %v365 = vunpack.c.l.b16 %v60
  %v366 = vunpack.c.h.b16 %v60
  %v367 = vunpack.c.l.b16 %v61
  %v368 = vunpack.c.h.b16 %v61
  %v369 = vunpack.c.l.b16 %v62
  %v370 = vunpack.c.h.b16 %v62
  %v371 = vunpack.c.l.b16 %v63
  %v372 = vunpack.c.h.b16 %v63
  %v373 = vunpack.c.l.b16 %v64
  %v374 = vunpack.c.h.b16 %v64
  %v375 = vunpack.c.l.b16 %v65
  %v376 = vunpack.c.h.b16 %v65
  %v377 = vunpack.c.l.b16 %v66
  %v378 = vunpack.c.h.b16 %v66
  %v379 = vunpack.c.l.b16 %v67
  %v380 = vunpack.c.h.b16 %v67
  %v381 = vunpack.c.l.b16 %v68
  %v382 = vunpack.c.h.b16 %v68
  %v383 = vunpack.c.l.b16 %v69
  %v384 = vunpack.c.h.b16 %v69
  %v385 = vunpack.c.l.b16 %v70
  %v386 = vunpack.c.h.b16 %v70
  %v387 = vunpack.c.l.b16 %v71
  %v388 = vunpack.c.h.b16 %v71
  %v389 = vunpack.c.l.b16 %v72
  %v390 = vunpack.c.h.b16 %v72
  %v391 = vunpack.c.l.b16 %v73
  %v392 = vunpack.c.h.b16 %v73
  %v393 = vunpack.c.l.b16 %v74
  %v394 = vunpack.c.h.b16 %v74
  %v395 = vunpack.c.l.b16 %v75
  %v396 = vunpack.c.h.b16 %v75
  %v397 = vunpack.c.l.b16 %v76
  %v398 = vunpack.c.h.b16 %v76
  %v399 = vunpack.c.l.b16 %v77
  %v400 = vunpack.c.h.b16 %v77
  %v401 = vunpack.c.l.b16 %v78
  %v402 = vunpack.c.h.b16 %v78
  %v403 = vunpack.c.l.b16 %v79
  %v404 = vunpack.c.h.b16 %v79
  %v405 = vunpack.c.l.b16 %v80
  %v406 = vunpack.c.h.b16 %v80
  %v407 = vunpack.c.l.b16 %v81
  %v408 = vunpack.c.h.b16 %v81
  %v409 = vunpack.c.l.b16 %v82
  %v410 = vunpack.c.h.b16 %v82
  %v411 = vunpack.c.l.b16 %v83
  %v412 = vunpack.c.h.b16 %v83
  %v413 = vunpack.c.l.b16 %v84
  %v414 = vunpack.c.h.b16 %v84
  %v415 = vunpack.c.l.b16 %v85
  %v416 = vunpack.c.h.b16 %v85
  %v417 = vunpack.c.l.b16 %v86
  %v418 = vunpack.c.h.b16 %v86
  %v419 = vunpack.c.l.b16 %v87
  %v420 = vunpack.c.h.b16 %v87
  %v421 = vunpack.c.l.b16 %v88
  %v422 = vunpack.c.h.b16 %v88
  %v423 = vunpack.c.l.b16 %v89
  %v424 = vunpack.c.h.b16 %v89
  %v425 = vunpack.c.l.b16 %v90
  %v426 = vunpack.c.h.b16 %v90
  %v427 = vunpack.c.l.b16 %v91
  %v428 = vunpack.c.h.b16 %v91
  %v429 = vunpack.c.l.b16 %v92
  %v430 = vunpack.c.h.b16 %v92
  %v431 = vunpack.c.l.b16 %v93
  %v432 = vunpack.c.h.b16 %v93
  %v433 = vunpack.c.l.b16 %v94
  %v434 = vunpack.c.h.b16 %v94
  %v435 = vunpack.c.l.b16 %v95
  %v436 = vunpack.c.h.b16 %v95
  %v437 = vunpack.c.l.b16 %v96
  %v438 = vunpack.c.h.b16 %v96
  %v439 = vunpack.c.l.b16 %v97
  %v440 = vunpack.c.h.b16 %v97
  %v441 = vunpack.c.l.b16 %v98
  %v442 = vunpack.c.h.b16 %v98
  %v443 = vunpack.c.l.b16 %v99
  %v444 = vunpack.c.h.b16 %v99
  %v445 = vunpack.c.l.b16 %v100
  %v446 = vunpack.c.h.b16 %v100
  %v447 = vunpack.c.l.b16 %v101
  %v448 = vunpack.c.h.b16 %v101
  %v449 = vunpack.c.l.b16 %v102
  %v450 = vunpack.c.h.b16 %v102
  %v451 = vunpack.c.l.b16 %v103
  %v452 = vunpack.c.h.b16 %v103
  %v453 = vunpack.c.l.b16 %v104
  %v454 = vunpack.c.h.b16 %v104
  %v455 = vunpack.c.l.b16 %v105
  %v456 = vunpack.c.h.b16 %v105
  %v457 = vunpack.c.l.b16 %v106
  %v458 = vunpack.c.h.b16 %v106
  %v459 = vunpack.c.l.b16 %v107
  %v460 = vunpack.c.h.b16 %v107
  %v461 = vunpack.c.l.b16 %v108
  %v462 = vunpack.c.h.b16 %v108
  %v463 = vunpack.c.l.b16 %v109
  %v464 = vunpack.c.h.b16 %v109
  %v465 = vunpack.c.l.b16 %v110
  %v466 = vunpack.c.h.b16 %v110
  %v467 = vunpack.c.l.b16 %v111
  %v468 = vunpack.c.h.b16 %v111
  %v469 = vunpack.c.l.b16 %v112
  %v470 = vunpack.c.h.b16 %v112
  %v471 = vunpack.c.l.b16 %v113
  %v472 = vunpack.c.h.b16 %v113
  %v473 = vunpack.c.l.b16 %v114
  %v474 = vunpack.c.h.b16 %v114
  %v475 = vunpack.c.l.b16 %v115
  %v476 = vunpack.c.h.b16 %v115
  %v477 = vunpack.c.l.b16 %v116
  %v478 = vunpack.c.h.b16 %v116
  %v479 = vunpack.c.l.b16 %v117
  %v480 = vunpack.c.h.b16 %v117
  %v481 = vunpack.c.l.b16 %v118
  %v482 = vunpack.c.h.b16 %v118
  %v483 = vunpack.c.l.b16 %v119
  %v484 = vunpack.c.h.b16 %v119
  %v485 = vunpack.c.l.b16 %v120
  %v486 = vunpack.c.h.b16 %v120
  %v487 = vunpack.c.l.b16 %v121
  %v488 = vunpack.c.h.b16 %v121
  %v489 = vunpack.c.l.b16 %v122
  %v490 = vunpack.c.h.b16 %v122
  %v491 = vunpack.c.l.b16 %v123
  %v492 = vunpack.c.h.b16 %v123
  %v493 = vunpack.c.l.b16 %v124
  %v494 = vunpack.c.h.b16 %v124
  %v495 = vunpack.c.l.b16 %v125
  %v496 = vunpack.c.h.b16 %v125
  %v497 = vunpack.c.l.b16 %v126
  %v498 = vunpack.c.h.b16 %v126
  %v499 = vunpack.c.l.b16 %v127
  %v500 = vunpack.c.h.b16 %v127
  %v501 = vunpack.c.l.b16 %v128
  %v502 = vunpack.c.h.b16 %v128
  %v503 = vunpack.c.l.b16 %v129
  %v504 = vunpack.c.h.b16 %v129
  %v505 = vunpack.c.l.b16 %v130
  %v506 = vunpack.c.h.b16 %v130
  %v507 = vunpack.c.l.b16 %v131
  %v508 = vunpack.c.h.b16 %v131
  %v509 = vunpack.c.l.b16 %v132
  %v510 = vunpack.c.h.b16 %v132
  %v511 = vunpack.c.l.b16 %v133
  %v512 = vunpack.c.h.b16 %v133
  %v513 = vunpack.c.l.b16 %v134
  %v514 = vunpack.c.h.b16 %v134
  %v515 = vunpack.c.l.b16 %v135
  %v516 = vunpack.c.h.b16 %v135
  %v517 = vunpack.c.l.b16 %v136
  %v518 = vunpack.c.h.b16 %v136
  %v519 = vunpack.c.l.b16 %v137
  %v520 = vunpack.c.h.b16 %v137
  %v521 = vunpack.c.l.b16 %v138
  %v522 = vunpack.c.h.b16 %v138
  %v523 = vunpack.c.l.b16 %v139
  %v524 = vunpack.c.h.b16 %v139
  %v525 = vunpack.c.l.b16 %v140
  %v526 = vunpack.c.h.b16 %v140
  %v527 = vunpack.c.l.b16 %v141
  %v528 = vunpack.c.h.b16 %v141
  %v529 = vunpack.c.l.b16 %v142
  %v530 = vunpack.c.h.b16 %v142
  %v531 = vunpack.c.l.b16 %v143
  %v532 = vunpack.c.h.b16 %v143
  %v533 = vunpack.c.l.b16 %v144
  %v534 = vunpack.c.h.b16 %v144
  %v535 = vunpack.c.l.b16 %v145
  %v536 = vunpack.c.h.b16 %v145
  %v537 = vunpack.c.l.b16 %v146
  %v538 = vunpack.c.h.b16 %v146
  %v539 = vunpack.c.l.b16 %v147
  %v540 = vunpack.c.h.b16 %v147
  %v541 = vunpack.c.l.b16 %v148
  %v542 = vunpack.c.h.b16 %v148
  %v543 = vunpack.c.l.b16 %v149
  %v544 = vunpack.c.h.b16 %v149
  %v545 = vunpack.c.l.b16 %v150
  %v546 = vunpack.c.h.b16 %v150
  %v547 = vunpack.c.l.b16 %v151
  %v548 = vunpack.c.h.b16 %v151
  %v549 = vunpack.c.l.b16 %v152
  %v550 = vunpack.c.h.b16 %v152
  %v551 = vunpack.c.l.b16 %v153
  %v552 = vunpack.c.h.b16 %v153
  %v553 = vunpack.c.l.b16 %v154
  %v554 = vunpack.c.h.b16 %v154
  %v555 = vunpack.c.l.b16 %v155
  %v556 = vunpack.c.h.b16 %v155
  %v557 = vunpack.c.l.b16 %v156
  %v558 = vunpack.c.h.b16 %v156
  %v559 = vunpack.c.l.b16 %v157
  %v560 = vunpack.c.h.b16 %v157
  %v561 = vunpack.c.l.b16 %v158
  %v562 = vunpack.c.h.b16 %v158
  %v563 = vunpack.c.l.b16 %v159
  %v564 = vunpack.c.h.b16 %v159
  %v565 = vunpack.c.l.b16 %v160
  %v566 = vunpack.c.h.b16 %v160
  %v567 = vpack.c.b16 %v315, %v311
  %v568 = vpack.c.b16 %v316, %v312
  %v569 = vpack.c.b16 %v317, %v313
  %v570 = vpack.c.b16 %v318, %v314
  %v571 = vpack.c.b16 %v323, %v319
  %v572 = vpack.c.b16 %v324, %v320
  %v573 = vpack.c.b16 %v325, %v321
  %v574 = vpack.c.b16 %v326, %v322
  %v575 = vpack.c.b16 %v331, %v327
  %v576 = vpack.c.b16 %v332, %v328
  %v577 = vpack.c.b16 %v333, %v329
  %v578 = vpack.c.b16 %v334, %v330
  %v579 = vpack.c.b16 %v339, %v335
  %v580 = vpack.c.b16 %v340, %v336
  %v581 = vpack.c.b16 %v341, %v337
  %v582 = vpack.c.b16 %v342, %v338
  %v583 = vpack.c.b16 %v347, %v343
  %v584 = vpack.c.b16 %v348, %v344
  %v585 = vpack.c.b16 %v349, %v345
  %v586 = vpack.c.b16 %v350, %v346
  %v587 = vpack.c.b16 %v355, %v351
  %v588 = vpack.c.b16 %v356, %v352
  %v589 = vpack.c.b16 %v357, %v353
  %v590 = vpack.c.b16 %v358, %v354
  %v591 = vpack.c.b16 %v363, %v359
  %v592 = vpack.c.b16 %v364, %v360
  %v593 = vpack.c.b16 %v365, %v361
  %v594 = vpack.c.b16 %v366, %v362
  %v595 = vpack.c.b16 %v371, %v367
  %v596 = vpack.c.b16 %v372, %v368
  %v597 = vpack.c.b16 %v373, %v369
  %v598 = vpack.c.b16 %v374, %v370
  %v599 = vpack.c.b16 %v379, %v375
  %v600 = vpack.c.b16 %v380, %v376
  %v601 = vpack.c.b16 %v381, %v377
  %v602 = vpack.c.b16 %v382, %v378
  %v603 = vpack.c.b16 %v387, %v383
  %v604 = vpack.c.b16 %v388, %v384
  %v605 = vpack.c.b16 %v389, %v385
  %v606 = vpack.c.b16 %v390, %v386
  %v607 = vpack.c.b16 %v395, %v391
  %v608 = vpack.c.b16 %v396, %v392
  %v609 = vpack.c.b16 %v397, %v393
  %v610 = vpack.c.b16 %v398, %v394
  %v611 = vpack.c.b16 %v403, %v399
  %v612 = vpack.c.b16 %v404, %v400
  %v613 = vpack.c.b16 %v405, %v401
  %v614 = vpack.c.b16 %v406, %v402
  %v615 = vpack.c.b16 %v411, %v407
  %v616 = vpack.c.b16 %v412, %v408
  %v617 = vpack.c.b16 %v413, %v409
  %v618 = vpack.c.b16 %v414, %v410
  %v619 = vpack.c.b16 %v419, %v415
  %v620 = vpack.c.b16 %v420, %v416
  %v621 = vpack.c.b16 %v421, %v417
  %v622 = vpack.c.b16 %v422, %v418
  %v623 = vpack.c.b16 %v427, %v423
  %v624 = vpack.c.b16 %v428, %v424
  %v625 = vpack.c.b16 %v429, %v425
  %v626 = vpack.c.b16 %v430, %v426
  %v627 = vpack.c.b16 %v435, %v431
  %v628 = vpack.c.b16 %v436, %v432
  %v629 = vpack.c.b16 %v437, %v433
  %v630 = vpack.c.b16 %v438, %v434
  %v631 = vpack.c.b16 %v443, %v439
  %v632 = vpack.c.b16 %v444, %v440
  %v633 = vpack.c.b16 %v445, %v441
  %v634 = vpack.c.b16 %v446, %v442
  %v635 = vpack.c.b16 %v451, %v447
  %v636 = vpack.c.b16 %v452, %v448
  %v637 = vpack.c.b16 %v453, %v449
  %v638 = vpack.c.b16 %v454, %v450
  %v639 = vpack.c.b16 %v459, %v455
  %v640 = vpack.c.b16 %v460, %v456
  %v641 = vpack.c.b16 %v461, %v457
  %v642 = vpack.c.b16 %v462, %v458
  %v643 = vpack.c.b16 %v467, %v463
  %v644 = vpack.c.b16 %v468, %v464
  %v645 = vpack.c.b16 %v469, %v465
  %v646 = vpack.c.b16 %v470, %v466
  %v647 = vpack.c.b16 %v475, %v471
  %v648 = vpack.c.b16 %v476, %v472
  %v649 = vpack.c.b16 %v477, %v473
  %v650 = vpack.c.b16 %v478, %v474
  %v651 = vpack.c.b16 %v483, %v479
  %v652 = vpack.c.b16 %v484, %v480
  %v653 = vpack.c.b16 %v485, %v481
  %v654 = vpack.c.b16 %v486, %v482
  %v655 = vpack.c.b16 %v491, %v487
  %v656 = vpack.c.b16 %v492, %v488
  %v657 = vpack.c.b16 %v493, %v489
  %v658 = vpack.c.b16 %v494, %v490
  %v659 = vpack.c.b16 %v499, %v495
  %v660 = vpack.c.b16 %v500, %v496
  %v661 = vpack.c.b16 %v501, %v497
  %v662 = vpack.c.b16 %v502, %v498
  %v663 = vpack.c.b16 %v507, %v503
  %v664 = vpack.c.b16 %v508, %v504
  %v665 = vpack.c.b16 %v509, %v505
  %v666 = vpack.c.b16 %v510, %v506
  %v667 = vpack.c.b16 %v515, %v511
  %v668 = vpack.c.b16 %v516, %v512
  %v669 = vpack.c.b16 %v517, %v513
  %v670 = vpack.c.b16 %v518, %v514
  %v671 = vpack.c.b16 %v523, %v519
  %v672 = vpack.c.b16 %v524, %v520
  %v673 = vpack.c.b16 %v525, %v521
  %v674 = vpack.c.b16 %v526, %v522
  %v675 = vpack.c.b16 %v531, %v527
  %v676 = vpack.c.b16 %v532, %v528
  %v677 = vpack.c.b16 %v533, %v529
  %v678 = vpack.c.b16 %v534, %v530
  %v679 = vpack.c.b16 %v539, %v535
  %v680 = vpack.c.b16 %v540, %v536
  %v681 = vpack.c.b16 %v541, %v537
  %v682 = vpack.c.b16 %v542, %v538
  %v683 = vpack.c.b16 %v547, %v543
  %v684 = vpack.c.b16 %v548, %v544
  %v685 = vpack.c.b16 %v549, %v545
  %v686 = vpack.c.b16 %v550, %v546
  %v687 = vpack.c.b16 %v555, %v551
  %v688 = vpack.c.b16 %v556, %v552
  %v689 = vpack.c.b16 %v557, %v553
  %v690 = vpack.c.b16 %v558, %v554
  %v691 = vpack.c.b16 %v563, %v559
  %v692 = vpack.c.b16 %v564, %v560
  %v693 = vpack.c.b16 %v565, %v561
  %v694 = vpack.c.b16 %v566, %v562
  %823 = vmatprep.subr.bf16.mxu0 %v568
  %824 = vmatpush1.bf16.msra.mxu0 %v567
  %825 = vmatprep.subr.bf16.mxu0 %v572
  %826 = vmatpush1.bf16.msra.mxu0 %v571
  %827 = vmatprep.subr.bf16.mxu0 %v576
  %828 = vmatpush1.bf16.msra.mxu0 %v575
  %829 = vmatprep.subr.bf16.mxu0 %v580
  %830 = vmatpush1.bf16.msra.mxu0 %v579
  %831 = vmatprep.subr.bf16.mxu0 %v584
  %832 = vmatpush1.bf16.msra.mxu0 %v583
  %833 = vmatprep.subr.bf16.mxu0 %v588
  %834 = vmatpush1.bf16.msra.mxu0 %v587
  %835 = vmatprep.subr.bf16.mxu0 %v592
  %836 = vmatpush1.bf16.msra.mxu0 %v591
  %837 = vmatprep.subr.bf16.mxu0 %v596
  %838 = vmatpush1.bf16.msra.mxu0 %v595
  %839 = vmatprep.subr.bf16.mxu0 %v600
  %840 = vmatpush1.bf16.msra.mxu0 %v599
  %841 = vmatprep.subr.bf16.mxu0 %v604
  %842 = vmatpush1.bf16.msra.mxu0 %v603
  %843 = vmatprep.subr.bf16.mxu0 %v608
  %844 = vmatpush1.bf16.msra.mxu0 %v607
  %845 = vmatprep.subr.bf16.mxu0 %v612
  %846 = vmatpush1.bf16.msra.mxu0 %v611
  %847 = vmatprep.subr.bf16.mxu0 %v616
  %848 = vmatpush1.bf16.msra.mxu0 %v615
  %849 = vmatprep.subr.bf16.mxu0 %v620
  %850 = vmatpush1.bf16.msra.mxu0 %v619
  %851 = vmatprep.subr.bf16.mxu0 %v624
  %852 = vmatpush1.bf16.msra.mxu0 %v623
  %853 = vmatprep.subr.bf16.mxu0 %v628
  %854 = vmatpush1.bf16.msra.mxu0 %v627
  %855 = vmatprep.mubr.bf16.mxu0 %v30
  %856 = vmatmul.mubr.bf16.gmra.mrb[0].mxu0 %v29
  %v857 = vpop.f32.mrb[0].mxu0
  %v858 = vadd.f32 %v166, %v857
  %v859 = vpop.f32.mrb[0].mxu0
  %v860 = vadd.f32 %v170, %v859
  %v861 = vpop.f32.mrb[0].mxu0
  %v862 = vadd.f32 %v166, %v861
  %v863 = vpop.f32.mrb[0].mxu0
  %v864 = vadd.f32 %v170, %v863
  %865 = vdwg.mxu0
  %866 = vmatprep.subr.bf16.mxu0 %v632
  %867 = vmatpush1.bf16.msra.mxu0 %v631
  %868 = vmatprep.subr.bf16.mxu0 %v636
  %869 = vmatpush1.bf16.msra.mxu0 %v635
  %870 = vmatprep.subr.bf16.mxu0 %v640
  %871 = vmatpush1.bf16.msra.mxu0 %v639
  %872 = vmatprep.subr.bf16.mxu0 %v644
  %873 = vmatpush1.bf16.msra.mxu0 %v643
  %874 = vmatprep.subr.bf16.mxu0 %v648
  %875 = vmatpush1.bf16.msra.mxu0 %v647
  %876 = vmatprep.subr.bf16.mxu0 %v652
  %877 = vmatpush1.bf16.msra.mxu0 %v651
  %878 = vmatprep.subr.bf16.mxu0 %v656
  %879 = vmatpush1.bf16.msra.mxu0 %v655
  %880 = vmatprep.subr.bf16.mxu0 %v660
  %881 = vmatpush1.bf16.msra.mxu0 %v659
  %882 = vmatprep.subr.bf16.mxu0 %v664
  %883 = vmatpush1.bf16.msra.mxu0 %v663
  %884 = vmatprep.subr.bf16.mxu0 %v668
  %885 = vmatpush1.bf16.msra.mxu0 %v667
  %886 = vmatprep.subr.bf16.mxu0 %v672
  %887 = vmatpush1.bf16.msra.mxu0 %v671
  %888 = vmatprep.subr.bf16.mxu0 %v676
  %889 = vmatpush1.bf16.msra.mxu0 %v675
  %890 = vmatprep.subr.bf16.mxu0 %v680
  %891 = vmatpush1.bf16.msra.mxu0 %v679
  %892 = vmatprep.subr.bf16.mxu0 %v684
  %893 = vmatpush1.bf16.msra.mxu0 %v683
  %894 = vmatprep.subr.bf16.mxu0 %v688
  %895 = vmatpush1.bf16.msra.mxu0 %v687
  %896 = vmatprep.subr.bf16.mxu0 %v692
  %897 = vmatpush1.bf16.msra.mxu0 %v691
  %898 = vmatprep.mubr.bf16.mxu0 %v32
  %899 = vmatmul.mubr.bf16.gmra.mrb[0].mxu0 %v31
  %v900 = vpop.f32.mrb[0].mxu0
  %v901 = vadd.f32 %v858, %v900
  %v902 = vpop.f32.mrb[0].mxu0
  %v903 = vadd.f32 %v860, %v902
  %v904 = vpop.f32.mrb[0].mxu0
  %v905 = vadd.f32 %v862, %v904
  %v906 = vpop.f32.mrb[0].mxu0
  %v907 = vadd.f32 %v864, %v906
  %908 = vdwg.mxu0
  %909 = vmatprep.subr.bf16.mxu0 %v570
  %910 = vmatpush1.bf16.msra.mxu0 %v569
  %911 = vmatprep.subr.bf16.mxu0 %v574
  %912 = vmatpush1.bf16.msra.mxu0 %v573
  %913 = vmatprep.subr.bf16.mxu0 %v578
  %914 = vmatpush1.bf16.msra.mxu0 %v577
  %915 = vmatprep.subr.bf16.mxu0 %v582
  %916 = vmatpush1.bf16.msra.mxu0 %v581
  %917 = vmatprep.subr.bf16.mxu0 %v586
  %918 = vmatpush1.bf16.msra.mxu0 %v585
  %919 = vmatprep.subr.bf16.mxu0 %v590
  %920 = vmatpush1.bf16.msra.mxu0 %v589
  %921 = vmatprep.subr.bf16.mxu0 %v594
  %922 = vmatpush1.bf16.msra.mxu0 %v593
  %923 = vmatprep.subr.bf16.mxu0 %v598
  %924 = vmatpush1.bf16.msra.mxu0 %v597
  %925 = vmatprep.subr.bf16.mxu0 %v602
  %926 = vmatpush1.bf16.msra.mxu0 %v601
  %927 = vmatprep.subr.bf16.mxu0 %v606
  %928 = vmatpush1.bf16.msra.mxu0 %v605
  %929 = vmatprep.subr.bf16.mxu0 %v610
  %930 = vmatpush1.bf16.msra.mxu0 %v609
  %931 = vmatprep.subr.bf16.mxu0 %v614
  %932 = vmatpush1.bf16.msra.mxu0 %v613
  %933 = vmatprep.subr.bf16.mxu0 %v618
  %934 = vmatpush1.bf16.msra.mxu0 %v617
  %935 = vmatprep.subr.bf16.mxu0 %v622
  %936 = vmatpush1.bf16.msra.mxu0 %v621
  %937 = vmatprep.subr.bf16.mxu0 %v626
  %938 = vmatpush1.bf16.msra.mxu0 %v625
  %939 = vmatprep.subr.bf16.mxu0 %v630
  %940 = vmatpush1.bf16.msra.mxu0 %v629
  %941 = vmatprep.mubr.bf16.mxu0 %v30
  %942 = vmatmul.mubr.bf16.gmra.mrb[0].mxu0 %v29
  %v943 = vpop.f32.mrb[0].mxu0
  %v944 = vadd.f32 %v174, %v943
  %v945 = vpop.f32.mrb[0].mxu0
  %v946 = vadd.f32 %v178, %v945
  %v947 = vpop.f32.mrb[0].mxu0
  %v948 = vadd.f32 %v174, %v947
  %v949 = vpop.f32.mrb[0].mxu0
  %v950 = vadd.f32 %v178, %v949
  %951 = vdwg.mxu0
  %952 = vmatprep.subr.bf16.mxu0 %v634
  %953 = vmatpush1.bf16.msra.mxu0 %v633
  %954 = vmatprep.subr.bf16.mxu0 %v638
  %955 = vmatpush1.bf16.msra.mxu0 %v637
  %956 = vmatprep.subr.bf16.mxu0 %v642
  %957 = vmatpush1.bf16.msra.mxu0 %v641
  %958 = vmatprep.subr.bf16.mxu0 %v646
  %959 = vmatpush1.bf16.msra.mxu0 %v645
  %960 = vmatprep.subr.bf16.mxu0 %v650
  %961 = vmatpush1.bf16.msra.mxu0 %v649
  %962 = vmatprep.subr.bf16.mxu0 %v654
  %963 = vmatpush1.bf16.msra.mxu0 %v653
  %964 = vmatprep.subr.bf16.mxu0 %v658
  %965 = vmatpush1.bf16.msra.mxu0 %v657
  %966 = vmatprep.subr.bf16.mxu0 %v662
  %967 = vmatpush1.bf16.msra.mxu0 %v661
  %968 = vmatprep.subr.bf16.mxu0 %v666
  %969 = vmatpush1.bf16.msra.mxu0 %v665
  %970 = vmatprep.subr.bf16.mxu0 %v670
  %971 = vmatpush1.bf16.msra.mxu0 %v669
  %972 = vmatprep.subr.bf16.mxu0 %v674
  %973 = vmatpush1.bf16.msra.mxu0 %v673
  %974 = vmatprep.subr.bf16.mxu0 %v678
  %975 = vmatpush1.bf16.msra.mxu0 %v677
  %976 = vmatprep.subr.bf16.mxu0 %v682
  %977 = vmatpush1.bf16.msra.mxu0 %v681
  %978 = vmatprep.subr.bf16.mxu0 %v686
  %979 = vmatpush1.bf16.msra.mxu0 %v685
  %980 = vmatprep.subr.bf16.mxu0 %v690
  %981 = vmatpush1.bf16.msra.mxu0 %v689
  %982 = vmatprep.subr.bf16.mxu0 %v694
  %983 = vmatpush1.bf16.msra.mxu0 %v693
  %984 = vmatprep.mubr.bf16.mxu0 %v32
  %985 = vmatmul.mubr.bf16.gmra.mrb[0].mxu0 %v31
  %v986 = vpop.f32.mrb[0].mxu0
  %v987 = vadd.f32 %v944, %v986
  %v988 = vpop.f32.mrb[0].mxu0
  %v989 = vadd.f32 %v946, %v988
  %v990 = vpop.f32.mrb[0].mxu0
  %v991 = vadd.f32 %v948, %v990
  %v992 = vpop.f32.mrb[0].mxu0
  %v993 = vadd.f32 %v950, %v992
  %994 = vdwg.mxu0
  %v995 = vmax.f32 %v901, 0.0
  %v996 = vmax.f32 %v903, 0.0
  %v997 = vmax.f32 %v987, 0.0
  %v998 = vmax.f32 %v989, 0.0
  %v999 = vmax.f32 %v905, 0.0
  %v1000 = vmax.f32 %v907, 0.0
  %v1001 = vmax.f32 %v991, 0.0
  %v1002 = vmax.f32 %v993, 0.0
  %v1003 = vpack.c.bf16 %v999, %v995
  %v1004 = vpack.c.bf16 %v1000, %v996
  %v1005 = vpack.c.bf16 %v1001, %v997
  %v1006 = vpack.c.bf16 %v1002, %v998
  %v1007 = vld [vmem:[%s3] sm:$0xf]
  %v1008 = vld [vmem:[%s3 + $0x4] sm:$0xf]
  %v1009 = vld [vmem:[%s3 + $0x8] sm:$0xf]
  %v1010 = vld [vmem:[%s3 + $0xc] sm:$0xf]
  %v1011 = vld [vmem:[%s3 + $0x10] sm:$0xf]
  %v1012 = vld [vmem:[%s3 + $0x14] sm:$0xf]
  %v1013 = vld [vmem:[%s3 + $0x18] sm:$0xf]
  %v1014 = vld [vmem:[%s3 + $0x1c] sm:$0xf]
  %v1015 = vld [vmem:[%s3 + $0x20] sm:$0xf]
  %v1016 = vld [vmem:[%s3 + $0x24] sm:$0xf]
  %v1017 = vld [vmem:[%s3 + $0x28] sm:$0xf]
  %v1018 = vld [vmem:[%s3 + $0x2c] sm:$0xf]
  %v1019 = vld [vmem:[%s3 + $0x30] sm:$0xf]
  %v1020 = vld [vmem:[%s3 + $0x34] sm:$0xf]
  %v1021 = vld [vmem:[%s3 + $0x38] sm:$0xf]
  %v1022 = vld [vmem:[%s3 + $0x3c] sm:$0xf]
  %v1023 = vld [vmem:[%s3 + $0x40] sm:$0xf]
  %v1024 = vld [vmem:[%s3 + $0x44] sm:$0xf]
  %v1025 = vld [vmem:[%s3 + $0x48] sm:$0xf]
  %v1026 = vld [vmem:[%s3 + $0x4c] sm:$0xf]
  %v1027 = vld [vmem:[%s3 + $0x50] sm:$0xf]
  %v1028 = vld [vmem:[%s3 + $0x54] sm:$0xf]
  %v1029 = vld [vmem:[%s3 + $0x58] sm:$0xf]
  %v1030 = vld [vmem:[%s3 + $0x5c] sm:$0xf]
  %v1031 = vld [vmem:[%s3 + $0x60] sm:$0xf]
  %v1032 = vld [vmem:[%s3 + $0x64] sm:$0xf]
  %v1033 = vld [vmem:[%s3 + $0x68] sm:$0xf]
  %v1034 = vld [vmem:[%s3 + $0x6c] sm:$0xf]
  %v1035 = vld [vmem:[%s3 + $0x70] sm:$0xf]
  %v1036 = vld [vmem:[%s3 + $0x74] sm:$0xf]
  %v1037 = vld [vmem:[%s3 + $0x78] sm:$0xf]
  %v1038 = vld [vmem:[%s3 + $0x7c] sm:$0xf]
  %v1039 = vld [vmem:[%s3 + $0x80] sm:$0xf]
  %v1040 = vld [vmem:[%s3 + $0x84] sm:$0xf]
  %v1041 = vld [vmem:[%s3 + $0x88] sm:$0xf]
  %v1042 = vld [vmem:[%s3 + $0x8c] sm:$0xf]
  %v1043 = vld [vmem:[%s3 + $0x90] sm:$0xf]
  %v1044 = vld [vmem:[%s3 + $0x94] sm:$0xf]
  %v1045 = vld [vmem:[%s3 + $0x98] sm:$0xf]
  %v1046 = vld [vmem:[%s3 + $0x9c] sm:$0xf]
  %v1047 = vld [vmem:[%s3 + $0xa0] sm:$0xf]
  %v1048 = vld [vmem:[%s3 + $0xa4] sm:$0xf]
  %v1049 = vld [vmem:[%s3 + $0xa8] sm:$0xf]
  %v1050 = vld [vmem:[%s3 + $0xac] sm:$0xf]
  %v1051 = vld [vmem:[%s3 + $0xb0] sm:$0xf]
  %v1052 = vld [vmem:[%s3 + $0xb4] sm:$0xf]
  %v1053 = vld [vmem:[%s3 + $0xb8] sm:$0xf]
  %v1054 = vld [vmem:[%s3 + $0xbc] sm:$0xf]
  %v1055 = vld [vmem:[%s3 + $0xc0] sm:$0xf]
  %v1056 = vld [vmem:[%s3 + $0xc4] sm:$0xf]
  %v1057 = vld [vmem:[%s3 + $0xc8] sm:$0xf]
  %v1058 = vld [vmem:[%s3 + $0xcc] sm:$0xf]
  %v1059 = vld [vmem:[%s3 + $0xd0] sm:$0xf]
  %v1060 = vld [vmem:[%s3 + $0xd4] sm:$0xf]
  %v1061 = vld [vmem:[%s3 + $0xd8] sm:$0xf]
  %v1062 = vld [vmem:[%s3 + $0xdc] sm:$0xf]
  %v1063 = vld [vmem:[%s3 + $0xe0] sm:$0xf]
  %v1064 = vld [vmem:[%s3 + $0xe4] sm:$0xf]
  %v1065 = vld [vmem:[%s3 + $0xe8] sm:$0xf]
  %v1066 = vld [vmem:[%s3 + $0xec] sm:$0xf]
  %v1067 = vld [vmem:[%s3 + $0xf0] sm:$0xf]
  %v1068 = vld [vmem:[%s3 + $0xf4] sm:$0xf]
  %v1069 = vld [vmem:[%s3 + $0xf8] sm:$0xf]
  %v1070 = vld [vmem:[%s3 + $0xfc] sm:$0xf]
  %v1071 = vld [vmem:[%s4] sm:$0x1]
  %v1073 = vlaneseq
  %v1074 = vshrl.u32 %v1073, 7
  %v1075 = vsub.s32 0, %v1074
  %v1076 = vrot.slane %v1071, %v1075
  %v1142 = vunpack.c.l.b16 %v1007
  %v1143 = vunpack.c.l.b16 %v1008
  %v1144 = vunpack.c.l.b16 %v1009
  %v1145 = vunpack.c.l.b16 %v1010
  %v1146 = vunpack.c.l.b16 %v1011
  %v1147 = vunpack.c.l.b16 %v1012
  %v1148 = vunpack.c.l.b16 %v1013
  %v1149 = vunpack.c.l.b16 %v1014
  %v1150 = vunpack.c.l.b16 %v1015
  %v1151 = vunpack.c.l.b16 %v1016
  %v1152 = vunpack.c.l.b16 %v1017
  %v1153 = vunpack.c.l.b16 %v1018
  %v1154 = vunpack.c.l.b16 %v1019
  %v1155 = vunpack.c.l.b16 %v1020
  %v1156 = vunpack.c.l.b16 %v1021
  %v1157 = vunpack.c.l.b16 %v1022
  %v1158 = vunpack.c.l.b16 %v1023
  %v1159 = vunpack.c.l.b16 %v1024
  %v1160 = vunpack.c.l.b16 %v1025
  %v1161 = vunpack.c.l.b16 %v1026
  %v1162 = vunpack.c.l.b16 %v1027
  %v1163 = vunpack.c.l.b16 %v1028
  %v1164 = vunpack.c.l.b16 %v1029
  %v1165 = vunpack.c.l.b16 %v1030
  %v1166 = vunpack.c.l.b16 %v1031
  %v1167 = vunpack.c.l.b16 %v1032
  %v1168 = vunpack.c.l.b16 %v1033
  %v1169 = vunpack.c.l.b16 %v1034
  %v1170 = vunpack.c.l.b16 %v1035
  %v1171 = vunpack.c.l.b16 %v1036
  %v1172 = vunpack.c.l.b16 %v1037
  %v1173 = vunpack.c.l.b16 %v1038
  %v1174 = vunpack.c.l.b16 %v1039
  %v1175 = vunpack.c.l.b16 %v1040
  %v1176 = vunpack.c.l.b16 %v1041
  %v1177 = vunpack.c.l.b16 %v1042
  %v1178 = vunpack.c.l.b16 %v1043
  %v1179 = vunpack.c.l.b16 %v1044
  %v1180 = vunpack.c.l.b16 %v1045
  %v1181 = vunpack.c.l.b16 %v1046
  %v1182 = vunpack.c.l.b16 %v1047
  %v1183 = vunpack.c.l.b16 %v1048
  %v1184 = vunpack.c.l.b16 %v1049
  %v1185 = vunpack.c.l.b16 %v1050
  %v1186 = vunpack.c.l.b16 %v1051
  %v1187 = vunpack.c.l.b16 %v1052
  %v1188 = vunpack.c.l.b16 %v1053
  %v1189 = vunpack.c.l.b16 %v1054
  %v1190 = vunpack.c.l.b16 %v1055
  %v1191 = vunpack.c.l.b16 %v1056
  %v1192 = vunpack.c.l.b16 %v1057
  %v1193 = vunpack.c.l.b16 %v1058
  %v1194 = vunpack.c.l.b16 %v1059
  %v1195 = vunpack.c.l.b16 %v1060
  %v1196 = vunpack.c.l.b16 %v1061
  %v1197 = vunpack.c.l.b16 %v1062
  %v1198 = vunpack.c.l.b16 %v1063
  %v1199 = vunpack.c.l.b16 %v1064
  %v1200 = vunpack.c.l.b16 %v1065
  %v1201 = vunpack.c.l.b16 %v1066
  %v1202 = vunpack.c.l.b16 %v1067
  %v1203 = vunpack.c.l.b16 %v1068
  %v1204 = vunpack.c.l.b16 %v1069
  %v1205 = vunpack.c.l.b16 %v1070
  %v1206 = vpack.c.b16 %v1143, %v1142
  %v1207 = vpack.c.b16 %v1145, %v1144
  %v1208 = vpack.c.b16 %v1147, %v1146
  %v1209 = vpack.c.b16 %v1149, %v1148
  %v1210 = vpack.c.b16 %v1151, %v1150
  %v1211 = vpack.c.b16 %v1153, %v1152
  %v1212 = vpack.c.b16 %v1155, %v1154
  %v1213 = vpack.c.b16 %v1157, %v1156
  %v1214 = vpack.c.b16 %v1159, %v1158
  %v1215 = vpack.c.b16 %v1161, %v1160
  %v1216 = vpack.c.b16 %v1163, %v1162
  %v1217 = vpack.c.b16 %v1165, %v1164
  %v1218 = vpack.c.b16 %v1167, %v1166
  %v1219 = vpack.c.b16 %v1169, %v1168
  %v1220 = vpack.c.b16 %v1171, %v1170
  %v1221 = vpack.c.b16 %v1173, %v1172
  %v1222 = vpack.c.b16 %v1175, %v1174
  %v1223 = vpack.c.b16 %v1177, %v1176
  %v1224 = vpack.c.b16 %v1179, %v1178
  %v1225 = vpack.c.b16 %v1181, %v1180
  %v1226 = vpack.c.b16 %v1183, %v1182
  %v1227 = vpack.c.b16 %v1185, %v1184
  %v1228 = vpack.c.b16 %v1187, %v1186
  %v1229 = vpack.c.b16 %v1189, %v1188
  %v1230 = vpack.c.b16 %v1191, %v1190
  %v1231 = vpack.c.b16 %v1193, %v1192
  %v1232 = vpack.c.b16 %v1195, %v1194
  %v1233 = vpack.c.b16 %v1197, %v1196
  %v1234 = vpack.c.b16 %v1199, %v1198
  %v1235 = vpack.c.b16 %v1201, %v1200
  %v1236 = vpack.c.b16 %v1203, %v1202
  %v1237 = vpack.c.b16 %v1205, %v1204
  %1270 = vmatprep.subr.bf16.mxu0 0
  %1271 = vmatpush1.bf16.msra.mxu0 %v1206
  %1272 = vmatprep.subr.bf16.mxu0 0
  %1273 = vmatpush1.bf16.msra.mxu0 %v1207
  %1274 = vmatprep.subr.bf16.mxu0 0
  %1275 = vmatpush1.bf16.msra.mxu0 %v1208
  %1276 = vmatprep.subr.bf16.mxu0 0
  %1277 = vmatpush1.bf16.msra.mxu0 %v1209
  %1278 = vmatprep.subr.bf16.mxu0 0
  %1279 = vmatpush1.bf16.msra.mxu0 %v1210
  %1280 = vmatprep.subr.bf16.mxu0 0
  %1281 = vmatpush1.bf16.msra.mxu0 %v1211
  %1282 = vmatprep.subr.bf16.mxu0 0
  %1283 = vmatpush1.bf16.msra.mxu0 %v1212
  %1284 = vmatprep.subr.bf16.mxu0 0
  %1285 = vmatpush1.bf16.msra.mxu0 %v1213
  %1286 = vmatprep.subr.bf16.mxu0 0
  %1287 = vmatpush1.bf16.msra.mxu0 %v1214
  %1288 = vmatprep.subr.bf16.mxu0 0
  %1289 = vmatpush1.bf16.msra.mxu0 %v1215
  %1290 = vmatprep.subr.bf16.mxu0 0
  %1291 = vmatpush1.bf16.msra.mxu0 %v1216
  %1292 = vmatprep.subr.bf16.mxu0 0
  %1293 = vmatpush1.bf16.msra.mxu0 %v1217
  %1294 = vmatprep.subr.bf16.mxu0 0
  %1295 = vmatpush1.bf16.msra.mxu0 %v1218
  %1296 = vmatprep.subr.bf16.mxu0 0
  %1297 = vmatpush1.bf16.msra.mxu0 %v1219
  %1298 = vmatprep.subr.bf16.mxu0 0
  %1299 = vmatpush1.bf16.msra.mxu0 %v1220
  %1300 = vmatprep.subr.bf16.mxu0 0
  %1301 = vmatpush1.bf16.msra.mxu0 %v1221
  %1302 = vmatprep.mubr.bf16.mxu0 %v1004
  %1303 = vmatmul.mubr.bf16.gmra.mrb[0].mxu0 %v1003
  %v1304 = vpop.f32.mrb[0].mxu0
  %v1305 = vadd.f32 %v1076, %v1304
  %v1306 = vpop.f32.mrb[0].mxu0
  %v1307 = vpop.f32.mrb[0].mxu0
  %v1308 = vadd.f32 %v1076, %v1307
  %v1309 = vpop.f32.mrb[0].mxu0
  %1310 = vdwg.mxu0
  %1311 = vmatprep.subr.bf16.mxu0 0
  %1312 = vmatpush1.bf16.msra.mxu0 %v1222
  %1313 = vmatprep.subr.bf16.mxu0 0
  %1314 = vmatpush1.bf16.msra.mxu0 %v1223
  %1315 = vmatprep.subr.bf16.mxu0 0
  %1316 = vmatpush1.bf16.msra.mxu0 %v1224
  %1317 = vmatprep.subr.bf16.mxu0 0
  %1318 = vmatpush1.bf16.msra.mxu0 %v1225
  %1319 = vmatprep.subr.bf16.mxu0 0
  %1320 = vmatpush1.bf16.msra.mxu0 %v1226
  %1321 = vmatprep.subr.bf16.mxu0 0
  %1322 = vmatpush1.bf16.msra.mxu0 %v1227
  %1323 = vmatprep.subr.bf16.mxu0 0
  %1324 = vmatpush1.bf16.msra.mxu0 %v1228
  %1325 = vmatprep.subr.bf16.mxu0 0
  %1326 = vmatpush1.bf16.msra.mxu0 %v1229
  %1327 = vmatprep.subr.bf16.mxu0 0
  %1328 = vmatpush1.bf16.msra.mxu0 %v1230
  %1329 = vmatprep.subr.bf16.mxu0 0
  %1330 = vmatpush1.bf16.msra.mxu0 %v1231
  %1331 = vmatprep.subr.bf16.mxu0 0
  %1332 = vmatpush1.bf16.msra.mxu0 %v1232
  %1333 = vmatprep.subr.bf16.mxu0 0
  %1334 = vmatpush1.bf16.msra.mxu0 %v1233
  %1335 = vmatprep.subr.bf16.mxu0 0
  %1336 = vmatpush1.bf16.msra.mxu0 %v1234
  %1337 = vmatprep.subr.bf16.mxu0 0
  %1338 = vmatpush1.bf16.msra.mxu0 %v1235
  %1339 = vmatprep.subr.bf16.mxu0 0
  %1340 = vmatpush1.bf16.msra.mxu0 %v1236
  %1341 = vmatprep.subr.bf16.mxu0 0
  %1342 = vmatpush1.bf16.msra.mxu0 %v1237
  %1343 = vmatprep.mubr.bf16.mxu0 %v1006
  %1344 = vmatmul.mubr.bf16.gmra.mrb[0].mxu0 %v1005
  %v1345 = vpop.f32.mrb[0].mxu0
  %v1346 = vadd.f32 %v1305, %v1345
  %v1347 = vpop.f32.mrb[0].mxu0
  %v1348 = vpop.f32.mrb[0].mxu0
  %v1349 = vadd.f32 %v1308, %v1348
  %v1350 = vpop.f32.mrb[0].mxu0
  %1351 = vdwg.mxu0
  %1352 = vst [vmem:[%s5] sm:$0xff] %v1346
  %1353 = vst [vmem:[%s5 + $0x8] sm:$0xff] %v1349
  // Predicated region
  $region22: #{classifier_forward.1} parent=0 // pred_check
    _
  $region23: #{classifier_forward.1} parent=0 // pred_check_branch
    %1355 = sbr.rel (0) target = $region25
  $region24: #{classifier_forward.1} parent=0 // pred_region
    _
  $region25: #{classifier_forward.1} parent=0 // pred_fallthru
    _
  // Predicated region
  $region26: #{classifier_forward.1} parent=0 // pred_check
    _
  $region27: #{classifier_forward.1} parent=0 // pred_check_branch
    %1357 = sbr.rel (0) target = $region29
  $region28: #{classifier_forward.1} parent=0 // pred_region
    _
  $region29: #{classifier_forward.1} parent=0 // pred_fallthru
    _

</llo_original>
